<compile_context>
chip_gen: v6e
topology: v6e:2x2x1
jax: 0.10.0
libtpu: 0.0.40
codegen_flags: <defaults>
</compile_context>

<pallas_src>
import math

import jax
import jax.numpy as jnp
from jax.experimental import pallas as pl
from jax.experimental.pallas import tpu as pltpu

IN_DIM = 51
H1 = 256
H2 = 512
OUT_DIM = 51


def _round_up(n, m):
    return ((n + m - 1) // m) * m


def mlp_kernel(x_ref, w1_ref, b1_ref, w2_ref, b2_ref, w3_ref, b3_ref, o_ref):
    # x_ref: (tb, 51) f32 -> cast to bf16 in-kernel (VPU), matmuls on MXU w/ f32 acc.
    x = x_ref[...].astype(jnp.bfloat16)
    # Layer 1: (tb, 51) @ (51, 256)
    h1 = jnp.dot(x, w1_ref[...], preferred_element_type=jnp.float32)
    h1 = jnp.maximum(h1 + b1_ref[...], 0.0)
    # Layer 2: (tb, 256) @ (256, 512)
    h2 = jnp.dot(h1.astype(jnp.bfloat16), w2_ref[...],
                 preferred_element_type=jnp.float32)
    h2 = jnp.maximum(h2 + b2_ref[...], 0.0)
    # Layer 3: (tb, 512) @ (512, 51)
    h3 = jnp.dot(h2.astype(jnp.bfloat16), w3_ref[...],
                 preferred_element_type=jnp.float32)
    o_ref[...] = jnp.maximum(h3 + b3_ref[...], 0.0)   # (tb, 51) f32, ReLU'd


def mlp_forward(x, prepared_params, *, block_b=1024):
    """x: (B, 51) f32.  prepared_params: bf16 weights [in,out] + f32 (1,N) biases.

    block_b=1024 is VMEM-safe on v5e/v6e/v7x (~8 MiB live at tb=1024); on v6e/v7x
    block_b=2048 is also fine under the 32 MiB default scoped VMEM.
    """
    w1, b1, w2, b2, w3, b3 = prepared_params
    B = x.shape[0]

    # Tile: multiple of 8, capped at block_b, and no larger than ~half the batch
    # so the grid has >=2 steps for large B (both v7x TensorCores stay busy).
    tb = max(8, min(block_b, _round_up(pl.cdiv(B, 2), 8)))
    grid = (pl.cdiv(B, tb),)   # ragged last block is masked by Pallas

    # Constant-index blocks: weights/biases stay VMEM-resident across grid steps.
    const = lambda a: pl.BlockSpec(a.shape, lambda i: (0, 0))

    out = pl.pallas_call(
        mlp_kernel,
        out_shape=jax.ShapeDtypeStruct((B, OUT_DIM), jnp.float32),
        grid=grid,
        in_specs=[
            pl.BlockSpec((tb, IN_DIM), lambda i: (i, 0)),   # streamed activations
            const(w1), const(b1),
            const(w2), const(b2),
            const(w3), const(b3),
        ],
        out_specs=pl.BlockSpec((tb, OUT_DIM), lambda i: (i, 0)),
        compiler_params=pltpu.CompilerParams(
            dimension_semantics=("parallel",),   # megacore sharding on v7x
        ),
    )(x, w1, b1, w2, b2, w3, b3)
    return out


def init_params(key):
    """Deterministic init mimicking nn.Linear's U(-1/sqrt(fan_in), 1/sqrt(fan_in)).
    Returned in [in, out] layout, f32 (the 'reference' parameters)."""
    dims = [(IN_DIM, H1), (H1, H2), (H2, OUT_DIM)]
    params = []
    for fan_in, fan_out in dims:
        kw, kb, key = jax.random.split(key, 3)
        bound = 1.0 / math.sqrt(fan_in)
        w = jax.random.uniform(kw, (fan_in, fan_out), jnp.float32, -bound, bound)
        b = jax.random.uniform(kb, (1, fan_out), jnp.float32, -bound, bound)
        params += [w, b]
    return params


def prepare_params(params):
    """Cast weights to bf16 (halves weight HBM traffic, 2x MXU rate); biases f32."""
    w1, b1, w2, b2, w3, b3 = params
    return [w1.astype(jnp.bfloat16), b1,
            w2.astype(jnp.bfloat16), b2,
            w3.astype(jnp.bfloat16), b3]


def reference_forward(x, params):
    """Pure-JAX reference mirroring the kernel's numerics (bf16 operands, f32 acc).
    Note: vs. the true f32 PyTorch model this carries ~bf16-level error (~1e-2 rel)."""
    w1, b1, w2, b2, w3, b3 = params

    def lin_relu(a, w, b):
        y = jnp.dot(a.astype(jnp.bfloat16), w.astype(jnp.bfloat16),
                    preferred_element_type=jnp.float32)
        return jnp.maximum(y + b, 0.0)

    h = lin_relu(x, w1, b1)
    h = lin_relu(h, w2, b2)
    h = lin_relu(h, w3, b3)
    return h


if __name__ == "__main__":
    key = jax.random.PRNGKey(0)
    kx, kx2, kp = jax.random.split(key, 3)

    params = init_params(kp)
    prepared = prepare_params(params)

    # Small aligned batch.
    batch = 8
    x = jax.random.normal(kx, (batch, IN_DIM), jnp.float32)
    out = jax.block_until_ready(mlp_forward(x, prepared))
    ref = reference_forward(x, params)
    assert out.shape == (batch, OUT_DIM), out.shape
    assert jnp.allclose(out, ref, atol=1e-3, rtol=1e-3), float(
        jnp.max(jnp.abs(out - ref)))

    # Ragged batch (not a multiple of the tile): exercises the masked last block
    # and a multi-step grid.
    batch2 = 37
    x2 = jax.random.normal(kx2, (batch2, IN_DIM), jnp.float32)
    out2 = jax.block_until_ready(mlp_forward(x2, prepared))
    ref2 = reference_forward(x2, params)
    assert out2.shape == (batch2, OUT_DIM), out2.shape
    assert jnp.allclose(out2, ref2, atol=1e-3, rtol=1e-3), float(
        jnp.max(jnp.abs(out2 - ref2)))

    print("KERNEL_OK")
</pallas_src>

<mosaic_0001>
module attributes {stable_mosaic.version = 11 : i64} {
  func.func @mlp_kernel(%arg0: i32, %arg1: memref<8x51xf32, #tpu.memory_space<vmem>>, %arg2: memref<51x256xbf16, #tpu.memory_space<vmem>>, %arg3: memref<1x256xf32, #tpu.memory_space<vmem>>, %arg4: memref<256x512xbf16, #tpu.memory_space<vmem>>, %arg5: memref<1x512xf32, #tpu.memory_space<vmem>>, %arg6: memref<512x51xbf16, #tpu.memory_space<vmem>>, %arg7: memref<1x51xf32, #tpu.memory_space<vmem>>, %arg8: memref<8x51xf32, #tpu.memory_space<vmem>>) attributes {dimension_semantics = [#tpu.dimension_semantics<parallel>], iteration_bounds = array<i64: 1>, scalar_prefetch = 0 : i64, scratch_operands = 0 : i64, tpu.core_type = #tpu.core_type<tc>, window_params = [{transform_indices = @transform_0, window_bounds = array<i64: 8, 51>}, {pipeline_mode = #tpu.pipeline_mode<synchronous>, transform_indices = @transform_1, window_bounds = array<i64: 51, 256>}, {pipeline_mode = #tpu.pipeline_mode<synchronous>, transform_indices = @transform_2, window_bounds = array<i64: 1, 256>}, {pipeline_mode = #tpu.pipeline_mode<synchronous>, transform_indices = @transform_3, window_bounds = array<i64: 256, 512>}, {pipeline_mode = #tpu.pipeline_mode<synchronous>, transform_indices = @transform_4, window_bounds = array<i64: 1, 512>}, {pipeline_mode = #tpu.pipeline_mode<synchronous>, transform_indices = @transform_5, window_bounds = array<i64: 512, 51>}, {pipeline_mode = #tpu.pipeline_mode<synchronous>, transform_indices = @transform_6, window_bounds = array<i64: 1, 51>}, {transform_indices = @transform_7, window_bounds = array<i64: 8, 51>}]} {
    %c0 = arith.constant 0 : index
    %c0_0 = arith.constant 0 : index
    %0 = vector.load %arg1[%c0, %c0_0] : memref<8x51xf32, #tpu.memory_space<vmem>>, vector<8x51xf32>
    %1 = arith.truncf %0 : vector<8x51xf32> to vector<8x51xbf16>
    %c0_1 = arith.constant 0 : index
    %c0_2 = arith.constant 0 : index
    %2 = vector.load %arg2[%c0_1, %c0_2] : memref<51x256xbf16, #tpu.memory_space<vmem>>, vector<51x256xbf16>
    %cst = arith.constant dense<0.000000e+00> : vector<8x256xf32>
    %3 = tpu.matmul %1, %2, %cst {dimension_numbers = #tpu.dot_dimension_numbers<[1], [0], [0], [1], [0, 0, 1, 1], [], []>} : vector<8x51xbf16>, vector<51x256xbf16>, vector<8x256xf32> -> vector<8x256xf32>
    %c0_3 = arith.constant 0 : index
    %c0_4 = arith.constant 0 : index
    %4 = vector.load %arg3[%c0_3, %c0_4] : memref<1x256xf32, #tpu.memory_space<vmem>>, vector<1x256xf32>
    %5 = vector.broadcast %4 : vector<1x256xf32> to vector<8x256xf32>
    %6 = arith.addf %3, %5 : vector<8x256xf32>
    %cst_5 = arith.constant 0.000000e+00 : f32
    %7 = vector.broadcast %cst_5 : f32 to vector<8x256xf32>
    %8 = arith.maximumf %6, %7 : vector<8x256xf32>
    %9 = arith.truncf %8 : vector<8x256xf32> to vector<8x256xbf16>
    %c0_6 = arith.constant 0 : index
    %c0_7 = arith.constant 0 : index
    %10 = vector.load %arg4[%c0_6, %c0_7] : memref<256x512xbf16, #tpu.memory_space<vmem>>, vector<256x512xbf16>
    %cst_8 = arith.constant dense<0.000000e+00> : vector<8x512xf32>
    %11 = tpu.matmul %9, %10, %cst_8 {dimension_numbers = #tpu.dot_dimension_numbers<[1], [0], [0], [1], [0, 0, 1, 1], [], []>} : vector<8x256xbf16>, vector<256x512xbf16>, vector<8x512xf32> -> vector<8x512xf32>
    %c0_9 = arith.constant 0 : index
    %c0_10 = arith.constant 0 : index
    %12 = vector.load %arg5[%c0_9, %c0_10] : memref<1x512xf32, #tpu.memory_space<vmem>>, vector<1x512xf32>
    %13 = vector.broadcast %12 : vector<1x512xf32> to vector<8x512xf32>
    %14 = arith.addf %11, %13 : vector<8x512xf32>
    %cst_11 = arith.constant 0.000000e+00 : f32
    %15 = vector.broadcast %cst_11 : f32 to vector<8x512xf32>
    %16 = arith.maximumf %14, %15 : vector<8x512xf32>
    %17 = arith.truncf %16 : vector<8x512xf32> to vector<8x512xbf16>
    %c0_12 = arith.constant 0 : index
    %c0_13 = arith.constant 0 : index
    %18 = vector.load %arg6[%c0_12, %c0_13] : memref<512x51xbf16, #tpu.memory_space<vmem>>, vector<512x51xbf16>
    %cst_14 = arith.constant dense<0.000000e+00> : vector<8x51xf32>
    %19 = tpu.matmul %17, %18, %cst_14 {dimension_numbers = #tpu.dot_dimension_numbers<[1], [0], [0], [1], [0, 0, 1, 1], [], []>} : vector<8x512xbf16>, vector<512x51xbf16>, vector<8x51xf32> -> vector<8x51xf32>
    %c0_15 = arith.constant 0 : index
    %c0_16 = arith.constant 0 : index
    %20 = vector.load %arg7[%c0_15, %c0_16] : memref<1x51xf32, #tpu.memory_space<vmem>>, vector<1x51xf32>
    %21 = vector.broadcast %20 : vector<1x51xf32> to vector<8x51xf32>
    %22 = arith.addf %19, %21 : vector<8x51xf32>
    %cst_17 = arith.constant 0.000000e+00 : f32
    %23 = vector.broadcast %cst_17 : f32 to vector<8x51xf32>
    %24 = arith.maximumf %22, %23 : vector<8x51xf32>
    %c0_18 = arith.constant 0 : index
    %c0_19 = arith.constant 0 : index
    %25 = vector.load %arg8[%c0_18, %c0_19] : memref<8x51xf32, #tpu.memory_space<vmem>>, vector<8x51xf32>
    tpu.vector_store %arg8[%c0_18, %c0_19], %24 {strides = array<i32>} : memref<8x51xf32, #tpu.memory_space<vmem>>, vector<8x51xf32>,
    return
  }
  func.func @transform_0(%arg0: i32) -> (i32, i32) {
    %c0_i32 = arith.constant 0 : i32
    %c0_i32_0 = arith.constant 0 : i32
    return %arg0, %c0_i32 : i32, i32
  }
  func.func @transform_1(%arg0: i32) -> (i32, i32) {
    %c0_i32 = arith.constant 0 : i32
    %c0_i32_0 = arith.constant 0 : i32
    %c0_i32_1 = arith.constant 0 : i32
    return %c0_i32, %c0_i32_0 : i32, i32
  }
  func.func @transform_2(%arg0: i32) -> (i32, i32) {
    %c0_i32 = arith.constant 0 : i32
    %c0_i32_0 = arith.constant 0 : i32
    %c0_i32_1 = arith.constant 0 : i32
    return %c0_i32, %c0_i32_0 : i32, i32
  }
  func.func @transform_3(%arg0: i32) -> (i32, i32) {
    %c0_i32 = arith.constant 0 : i32
    %c0_i32_0 = arith.constant 0 : i32
    %c0_i32_1 = arith.constant 0 : i32
    return %c0_i32, %c0_i32_0 : i32, i32
  }
  func.func @transform_4(%arg0: i32) -> (i32, i32) {
    %c0_i32 = arith.constant 0 : i32
    %c0_i32_0 = arith.constant 0 : i32
    %c0_i32_1 = arith.constant 0 : i32
    return %c0_i32, %c0_i32_0 : i32, i32
  }
  func.func @transform_5(%arg0: i32) -> (i32, i32) {
    %c0_i32 = arith.constant 0 : i32
    %c0_i32_0 = arith.constant 0 : i32
    %c0_i32_1 = arith.constant 0 : i32
    return %c0_i32, %c0_i32_0 : i32, i32
  }
  func.func @transform_6(%arg0: i32) -> (i32, i32) {
    %c0_i32 = arith.constant 0 : i32
    %c0_i32_0 = arith.constant 0 : i32
    %c0_i32_1 = arith.constant 0 : i32
    return %c0_i32, %c0_i32_0 : i32, i32
  }
  func.func @transform_7(%arg0: i32) -> (i32, i32) {
    %c0_i32 = arith.constant 0 : i32
    %c0_i32_0 = arith.constant 0 : i32
    return %arg0, %c0_i32 : i32, i32
  }
}

</mosaic_0001>

<llo_original>
// kernel: tpu_custom_call.1
$region0: #{tpu_custom_call.1}
  #allocation0 [shape = 'u32[]', space=smem, size = 0x4, offset = 0x4, fixed_abs, tag = 'smem constant byte address 0x4 - core index']
  #allocation1 [shape = 'u32[144,128]{1,0:T(1,128)}', space=vmem, size = 0x12000, scoped, tag = 'internal scratch']
  %s0 = inlined_call_operand.vmem [shape: f32[8,51], index: 0, kind: input, shape index: {}]
  %s1 = inlined_call_operand.vmem [shape: bf16[51,256], index: 1, kind: input, shape index: {}]
  %s2 = inlined_call_operand.vmem [shape: f32[1,256], index: 2, kind: input, shape index: {}]
  %s3 = inlined_call_operand.hbm [shape: bf16[256,512], index: 3, kind: input, shape index: {}]
  %s4 = inlined_call_operand.vmem [shape: f32[1,512], index: 4, kind: input, shape index: {}]
  %s5 = inlined_call_operand.vmem [shape: bf16[512,51], index: 5, kind: input, shape index: {}]
  %s6 = inlined_call_operand.vmem [shape: f32[1,51], index: 6, kind: input, shape index: {}]
  %s7 = inlined_call_operand.hbm [shape: f32[8,51], index: 7, kind: output, shape index: {}]
  %s8 = sld [smem:[#allocation0]]
  $region42: #{tpu_custom_call.1} parent=0
    _
  %s10 = ssub.s32 1, %s8
  %s11 = scalar_select 0, %s10, %s8
  $region1: #{tpu_custom_call.1} parent=0
    #allocation2 [shape = 'u8[262144]{0}', space=vmem, size = 0x40000, scoped, tag = 'input window, operand 3, single buffered']
    #allocation3 [shape = 's32[1]{0}', space=sflag, size = 0x4, scoped, tag = 'scoped memory for tpu_custom_call.1']
    #allocation4 [shape = 's32[1]{0}', space=sflag, size = 0x4, scoped, tag = 'scoped memory for tpu_custom_call.1']
    #allocation5 [shape = 'u8[4096]{0}', space=vmem, size = 0x1000, scoped, tag = 'output window, operand 0, single buffered']
    %12 = vsyncpa [#allocation3], 0
    %13 = vsyncpa [#allocation4], 0
    // Predicated region
    $region2: #{tpu_custom_call.1} parent=1 // pred_check
      _
    $region3: #{tpu_custom_call.1} parent=1 // pred_check_branch
      %15 = sbr.rel (0) target = $region5
    $region4: #{tpu_custom_call.1} parent=1 // pred_region
      _
    $region5: #{tpu_custom_call.1} parent=1 // pred_fallthru
      _
    // Predicated region
    $region6: #{tpu_custom_call.1} parent=1 // pred_check
      _
    $region7: #{tpu_custom_call.1} parent=1 // pred_check_branch
      %17 = sbr.rel (0) target = $region9
    $region8: #{tpu_custom_call.1} parent=1 // pred_region
      _
    $region9: #{tpu_custom_call.1} parent=1 // pred_fallthru
      _
    // Predicated region
    $region10: #{tpu_custom_call.1} parent=1 // pred_check
      _
    $region11: #{tpu_custom_call.1} parent=1 // pred_check_branch
      %19 = sbr.rel (0) target = $region13
    $region12: #{tpu_custom_call.1} parent=1 // pred_region
      _
    $region13: #{tpu_custom_call.1} parent=1 // pred_fallthru
      _
    // Predicated region
    $region14: #{tpu_custom_call.1} parent=1 // pred_check
      _
    $region15: #{tpu_custom_call.1} parent=1 // pred_check_branch
      %21 = sbr.rel (0) target = $region17
    $region16: #{tpu_custom_call.1} parent=1 // pred_region
      %s23 = ssub.s32 8192, 8192
      %24 = vsyncadd [#allocation3], %s23
      %s25 = sshll.u32 [#allocation2], 4
      %s26 = int_to_ptr.vmem [resolvable:$true] %s25
      %31 = dma.hbm_to_vmem [thread:$0]  %s3, 8192, %s26, [#allocation3], 256, 256, 16
    $region17: #{tpu_custom_call.1} parent=1 // pred_fallthru
      _
    // Predicated region
    $region18: #{tpu_custom_call.1} parent=1 // pred_check
      _
    $region19: #{tpu_custom_call.1} parent=1 // pred_check_branch
      %33 = sbr.rel (0) target = $region21
    $region20: #{tpu_custom_call.1} parent=1 // pred_region
      _
    $region21: #{tpu_custom_call.1} parent=1 // pred_fallthru
      _
    // Predicated region
    $region22: #{tpu_custom_call.1} parent=1 // pred_check
      _
    $region23: #{tpu_custom_call.1} parent=1 // pred_check_branch
      %35 = sbr.rel (0) target = $region25
    $region24: #{tpu_custom_call.1} parent=1 // pred_region
      _
    $region25: #{tpu_custom_call.1} parent=1 // pred_fallthru
      _
    // Predicated region
    $region26: #{tpu_custom_call.1} parent=1 // pred_check
      _
    $region27: #{tpu_custom_call.1} parent=1 // pred_check_branch
      %37 = sbr.rel (0) target = $region29
    $region28: #{tpu_custom_call.1} parent=1 // pred_region
      _
    $region29: #{tpu_custom_call.1} parent=1 // pred_fallthru
      _
    // Predicated region
    $region30: #{tpu_custom_call.1} parent=1 // pred_check
      _
    $region31: #{tpu_custom_call.1} parent=1 // pred_check_branch
      %39 = sbr.rel (0) target = $region33
    $region32: #{tpu_custom_call.1} parent=1 // pred_region
      %40 = dma.done [#allocation3], 8192
    $region33: #{tpu_custom_call.1} parent=1 // pred_fallthru
      _
    %v42 = vld [vmem:[%s0] sm:$0xff]
    %v43 = vpack.c.bf16 %v42, %v42
    %v44 = vld [vmem:[%s1] sm:$0xff]
    %v45 = vld [vmem:[%s1 + $0x8] sm:$0xff]
    %v46 = vld [vmem:[%s1 + $0x10] sm:$0xff]
    %v47 = vld [vmem:[%s1 + $0x18] sm:$0xff]
    %v48 = vld [vmem:[%s1 + $0x20] sm:$0xff]
    %v49 = vld [vmem:[%s1 + $0x28] sm:$0xff]
    %v50 = vld [vmem:[%s1 + $0x30] sm:$0x33]
    %v51 = vld [vmem:[%s2] sm:$0x3]
    %v53 = vlaneseq
    %v54 = vshrl.u32 %v53, 7
    %v55 = vsub.s32 0, %v54
    %v56 = vrot.slane %v51, %v55
    %v57 = vlaneseq
    %v58 = vshrl.u32 %v57, 7
    %v59 = vsub.s32 1, %v58
    %v60 = vrot.slane %v51, %v59
    %v70 = vunpack.c.l.b16 %v44
    %v71 = vunpack.c.h.b16 %v44
    %v72 = vunpack.c.l.b16 %v45
    %v73 = vunpack.c.h.b16 %v45
    %v74 = vunpack.c.l.b16 %v46
    %v75 = vunpack.c.h.b16 %v46
    %v76 = vunpack.c.l.b16 %v47
    %v77 = vunpack.c.h.b16 %v47
    %v78 = vunpack.c.l.b16 %v48
    %v79 = vunpack.c.h.b16 %v48
    %v80 = vunpack.c.l.b16 %v49
    %v81 = vunpack.c.h.b16 %v49
    %v82 = vunpack.c.l.b16 %v50
    %v83 = vunpack.c.h.b16 %v50
    %v84 = vpack.c.b16 %v72, %v70
    %v85 = vpack.c.b16 %v73, %v71
    %v86 = vpack.c.b16 %v76, %v74
    %v87 = vpack.c.b16 %v77, %v75
    %v88 = vpack.c.b16 %v80, %v78
    %v89 = vpack.c.b16 %v81, %v79
    %v90 = vpack.c.b16 %v82, %v82
    %v91 = vpack.c.b16 %v83, %v83
    %vm98 = vcmask 416768
    %v100 = vsel %vm98, %v43, 0
    %vm102 = vcmask 1040384
    %vm103 = vcmask 1041408
    %v104 = vsel %vm102, 4294967295, 65535
    %v105 = vsel %vm103, %v104, 0
    %v107 = vand.u32 %v90, %v105
    %v110 = vand.u32 %v91, %v105
    %112 = vmatprep.subr.bf16.mxu0 0
    %113 = vmatpush1.bf16.msra.mxu0 0
    %114 = vmatprep.subr.bf16.mxu0 0
    %115 = vmatpush1.bf16.msra.mxu0 0
    %116 = vmatprep.subr.bf16.mxu0 0
    %117 = vmatpush1.bf16.msra.mxu0 0
    %118 = vmatprep.subr.bf16.mxu0 0
    %119 = vmatpush1.bf16.msra.mxu0 0
    %120 = vmatprep.subr.bf16.mxu0 %v110
    %121 = vmatpush1.bf16.msra.mxu0 %v107
    %122 = vmatprep.subr.bf16.mxu0 %v89
    %123 = vmatpush1.bf16.msra.mxu0 %v88
    %124 = vmatprep.subr.bf16.mxu0 %v87
    %125 = vmatpush1.bf16.msra.mxu0 %v86
    %126 = vmatprep.subr.bf16.mxu0 %v85
    %127 = vmatpush1.bf16.msra.mxu0 %v84
    %128 = vmatprep.subr.bf16.mxu0 0
    %129 = vmatpush2.bf16.msra.mxu0 0
    %130 = vmatprep.subr.bf16.mxu0 0
    %131 = vmatpush2.bf16.msra.mxu0 0
    %132 = vmatprep.subr.bf16.mxu0 0
    %133 = vmatpush2.bf16.msra.mxu0 0
    %134 = vmatprep.subr.bf16.mxu0 0
    %135 = vmatpush2.bf16.msra.mxu0 0
    %136 = vmatprep.subr.bf16.mxu0 0
    %137 = vmatpush2.bf16.msra.mxu0 0
    %138 = vmatprep.subr.bf16.mxu0 0
    %139 = vmatpush2.bf16.msra.mxu0 0
    %140 = vmatprep.subr.bf16.mxu0 0
    %141 = vmatpush2.bf16.msra.mxu0 0
    %142 = vmatprep.subr.bf16.mxu0 0
    %143 = vmatpush2.bf16.msra.mxu0 0
    %144 = vmatprep.mubr.bf16.mxu0 0
    %145 = vmatmul.mubr.bf16.gmra.mxu0 %v100
    %v146 = vpop.f32.mrf.mxu0
    %v147 = vadd.f32 %v56, %v146
    %v148 = vpop.f32.mrf.mxu0
    %v149 = vadd.f32 %v60, %v148
    %v150 = vpop.f32.mrf.mxu0
    %v151 = vpop.f32.mrf.mxu0
    %152 = vdwg.mxu0
    %v153 = vmax.f32 %v147, 0.0
    %v154 = vmax.f32 %v149, 0.0
    %v155 = vpack.c.bf16 %v153, %v153
    %v156 = vpack.c.bf16 %v154, %v154
    %v157 = vld [vmem:[#allocation2] sm:$0xff]
    %v158 = vld [vmem:[#allocation2 + $0x8] sm:$0xff]
    %v159 = vld [vmem:[#allocation2 + $0x10] sm:$0xff]
    %v160 = vld [vmem:[#allocation2 + $0x18] sm:$0xff]
    %v161 = vld [vmem:[#allocation2 + $0x20] sm:$0xff]
    %v162 = vld [vmem:[#allocation2 + $0x28] sm:$0xff]
    %v163 = vld [vmem:[#allocation2 + $0x30] sm:$0xff]
    %v164 = vld [vmem:[#allocation2 + $0x38] sm:$0xff]
    %v165 = vld [vmem:[#allocation2 + $0x40] sm:$0xff]
    %v166 = vld [vmem:[#allocation2 + $0x48] sm:$0xff]
    %v167 = vld [vmem:[#allocation2 + $0x50] sm:$0xff]
    %v168 = vld [vmem:[#allocation2 + $0x58] sm:$0xff]
    %v169 = vld [vmem:[#allocation2 + $0x60] sm:$0xff]
    %v170 = vld [vmem:[#allocation2 + $0x68] sm:$0xff]
    %v171 = vld [vmem:[#allocation2 + $0x70] sm:$0xff]
    %v172 = vld [vmem:[#allocation2 + $0x78] sm:$0xff]
    %v173 = vld [vmem:[#allocation2 + $0x80] sm:$0xff]
    %v174 = vld [vmem:[#allocation2 + $0x88] sm:$0xff]
    %v175 = vld [vmem:[#allocation2 + $0x90] sm:$0xff]
    %v176 = vld [vmem:[#allocation2 + $0x98] sm:$0xff]
    %v177 = vld [vmem:[#allocation2 + $0xa0] sm:$0xff]
    %v178 = vld [vmem:[#allocation2 + $0xa8] sm:$0xff]
    %v179 = vld [vmem:[#allocation2 + $0xb0] sm:$0xff]
    %v180 = vld [vmem:[#allocation2 + $0xb8] sm:$0xff]
    %v181 = vld [vmem:[#allocation2 + $0xc0] sm:$0xff]
    %v182 = vld [vmem:[#allocation2 + $0xc8] sm:$0xff]
    %v183 = vld [vmem:[#allocation2 + $0xd0] sm:$0xff]
    %v184 = vld [vmem:[#allocation2 + $0xd8] sm:$0xff]
    %v185 = vld [vmem:[#allocation2 + $0xe0] sm:$0xff]
    %v186 = vld [vmem:[#allocation2 + $0xe8] sm:$0xff]
    %v187 = vld [vmem:[#allocation2 + $0xf0] sm:$0xff]
    %v188 = vld [vmem:[#allocation2 + $0xf8] sm:$0xff]
    %v189 = vld [vmem:[#allocation2 + $0x100] sm:$0xff]
    %v190 = vld [vmem:[#allocation2 + $0x108] sm:$0xff]
    %v191 = vld [vmem:[#allocation2 + $0x110] sm:$0xff]
    %v192 = vld [vmem:[#allocation2 + $0x118] sm:$0xff]
    %v193 = vld [vmem:[#allocation2 + $0x120] sm:$0xff]
    %v194 = vld [vmem:[#allocation2 + $0x128] sm:$0xff]
    %v195 = vld [vmem:[#allocation2 + $0x130] sm:$0xff]
    %v196 = vld [vmem:[#allocation2 + $0x138] sm:$0xff]
    %v197 = vld [vmem:[#allocation2 + $0x140] sm:$0xff]
    %v198 = vld [vmem:[#allocation2 + $0x148] sm:$0xff]
    %v199 = vld [vmem:[#allocation2 + $0x150] sm:$0xff]
    %v200 = vld [vmem:[#allocation2 + $0x158] sm:$0xff]
    %v201 = vld [vmem:[#allocation2 + $0x160] sm:$0xff]
    %v202 = vld [vmem:[#allocation2 + $0x168] sm:$0xff]
    %v203 = vld [vmem:[#allocation2 + $0x170] sm:$0xff]
    %v204 = vld [vmem:[#allocation2 + $0x178] sm:$0xff]
    %v205 = vld [vmem:[#allocation2 + $0x180] sm:$0xff]
    %v206 = vld [vmem:[#allocation2 + $0x188] sm:$0xff]
    %v207 = vld [vmem:[#allocation2 + $0x190] sm:$0xff]
    %v208 = vld [vmem:[#allocation2 + $0x198] sm:$0xff]
    %v209 = vld [vmem:[#allocation2 + $0x1a0] sm:$0xff]
    %v210 = vld [vmem:[#allocation2 + $0x1a8] sm:$0xff]
    %v211 = vld [vmem:[#allocation2 + $0x1b0] sm:$0xff]
    %v212 = vld [vmem:[#allocation2 + $0x1b8] sm:$0xff]
    %v213 = vld [vmem:[#allocation2 + $0x1c0] sm:$0xff]
    %v214 = vld [vmem:[#allocation2 + $0x1c8] sm:$0xff]
    %v215 = vld [vmem:[#allocation2 + $0x1d0] sm:$0xff]
    %v216 = vld [vmem:[#allocation2 + $0x1d8] sm:$0xff]
    %v217 = vld [vmem:[#allocation2 + $0x1e0] sm:$0xff]
    %v218 = vld [vmem:[#allocation2 + $0x1e8] sm:$0xff]
    %v219 = vld [vmem:[#allocation2 + $0x1f0] sm:$0xff]
    %v220 = vld [vmem:[#allocation2 + $0x1f8] sm:$0xff]
    %v221 = vld [vmem:[%s4] sm:$0xf]
    %v223 = vlaneseq
    %v224 = vshrl.u32 %v223, 7
    %v225 = vsub.s32 0, %v224
    %v226 = vrot.slane %v221, %v225
    %v227 = vlaneseq
    %v228 = vshrl.u32 %v227, 7
    %v229 = vsub.s32 1, %v228
    %v230 = vrot.slane %v221, %v229
    %v231 = vlaneseq
    %v232 = vshrl.u32 %v231, 7
    %v233 = vsub.s32 2, %v232
    %v234 = vrot.slane %v221, %v233
    %v235 = vlaneseq
    %v236 = vshrl.u32 %v235, 7
    %v237 = vsub.s32 3, %v236
    %v238 = vrot.slane %v221, %v237
    %v307 = vunpack.c.l.b16 %v157
    %v308 = vunpack.c.h.b16 %v157
    %v309 = vunpack.c.l.b16 %v158
    %v310 = vunpack.c.h.b16 %v158
    %v311 = vunpack.c.l.b16 %v159
    %v312 = vunpack.c.h.b16 %v159
    %v313 = vunpack.c.l.b16 %v160
    %v314 = vunpack.c.h.b16 %v160
    %v315 = vunpack.c.l.b16 %v161
    %v316 = vunpack.c.h.b16 %v161
    %v317 = vunpack.c.l.b16 %v162
    %v318 = vunpack.c.h.b16 %v162
    %v319 = vunpack.c.l.b16 %v163
    %v320 = vunpack.c.h.b16 %v163
    %v321 = vunpack.c.l.b16 %v164
    %v322 = vunpack.c.h.b16 %v164
    %v323 = vunpack.c.l.b16 %v165
    %v324 = vunpack.c.h.b16 %v165
    %v325 = vunpack.c.l.b16 %v166
    %v326 = vunpack.c.h.b16 %v166
    %v327 = vunpack.c.l.b16 %v167
    %v328 = vunpack.c.h.b16 %v167
    %v329 = vunpack.c.l.b16 %v168
    %v330 = vunpack.c.h.b16 %v168
    %v331 = vunpack.c.l.b16 %v169
    %v332 = vunpack.c.h.b16 %v169
    %v333 = vunpack.c.l.b16 %v170
    %v334 = vunpack.c.h.b16 %v170
    %v335 = vunpack.c.l.b16 %v171
    %v336 = vunpack.c.h.b16 %v171
    %v337 = vunpack.c.l.b16 %v172
    %v338 = vunpack.c.h.b16 %v172
    %v339 = vunpack.c.l.b16 %v173
    %v340 = vunpack.c.h.b16 %v173
    %v341 = vunpack.c.l.b16 %v174
    %v342 = vunpack.c.h.b16 %v174
    %v343 = vunpack.c.l.b16 %v175
    %v344 = vunpack.c.h.b16 %v175
    %v345 = vunpack.c.l.b16 %v176
    %v346 = vunpack.c.h.b16 %v176
    %v347 = vunpack.c.l.b16 %v177
    %v348 = vunpack.c.h.b16 %v177
    %v349 = vunpack.c.l.b16 %v178
    %v350 = vunpack.c.h.b16 %v178
    %v351 = vunpack.c.l.b16 %v179
    %v352 = vunpack.c.h.b16 %v179
    %v353 = vunpack.c.l.b16 %v180
    %v354 = vunpack.c.h.b16 %v180
    %v355 = vunpack.c.l.b16 %v181
    %v356 = vunpack.c.h.b16 %v181
    %v357 = vunpack.c.l.b16 %v182
    %v358 = vunpack.c.h.b16 %v182
    %v359 = vunpack.c.l.b16 %v183
    %v360 = vunpack.c.h.b16 %v183
    %v361 = vunpack.c.l.b16 %v184
    %v362 = vunpack.c.h.b16 %v184
    %v363 = vunpack.c.l.b16 %v185
    %v364 = vunpack.c.h.b16 %v185
    %v365 = vunpack.c.l.b16 %v186
    %v366 = vunpack.c.h.b16 %v186
    %v367 = vunpack.c.l.b16 %v187
    %v368 = vunpack.c.h.b16 %v187
    %v369 = vunpack.c.l.b16 %v188
    %v370 = vunpack.c.h.b16 %v188
    %v371 = vunpack.c.l.b16 %v189
    %v372 = vunpack.c.h.b16 %v189
    %v373 = vunpack.c.l.b16 %v190
    %v374 = vunpack.c.h.b16 %v190
    %v375 = vunpack.c.l.b16 %v191
    %v376 = vunpack.c.h.b16 %v191
    %v377 = vunpack.c.l.b16 %v192
    %v378 = vunpack.c.h.b16 %v192
    %v379 = vunpack.c.l.b16 %v193
    %v380 = vunpack.c.h.b16 %v193
    %v381 = vunpack.c.l.b16 %v194
    %v382 = vunpack.c.h.b16 %v194
    %v383 = vunpack.c.l.b16 %v195
    %v384 = vunpack.c.h.b16 %v195
    %v385 = vunpack.c.l.b16 %v196
    %v386 = vunpack.c.h.b16 %v196
    %v387 = vunpack.c.l.b16 %v197
    %v388 = vunpack.c.h.b16 %v197
    %v389 = vunpack.c.l.b16 %v198
    %v390 = vunpack.c.h.b16 %v198
    %v391 = vunpack.c.l.b16 %v199
    %v392 = vunpack.c.h.b16 %v199
    %v393 = vunpack.c.l.b16 %v200
    %v394 = vunpack.c.h.b16 %v200
    %v395 = vunpack.c.l.b16 %v201
    %v396 = vunpack.c.h.b16 %v201
    %v397 = vunpack.c.l.b16 %v202
    %v398 = vunpack.c.h.b16 %v202
    %v399 = vunpack.c.l.b16 %v203
    %v400 = vunpack.c.h.b16 %v203
    %v401 = vunpack.c.l.b16 %v204
    %v402 = vunpack.c.h.b16 %v204
    %v403 = vunpack.c.l.b16 %v205
    %v404 = vunpack.c.h.b16 %v205
    %v405 = vunpack.c.l.b16 %v206
    %v406 = vunpack.c.h.b16 %v206
    %v407 = vunpack.c.l.b16 %v207
    %v408 = vunpack.c.h.b16 %v207
    %v409 = vunpack.c.l.b16 %v208
    %v410 = vunpack.c.h.b16 %v208
    %v411 = vunpack.c.l.b16 %v209
    %v412 = vunpack.c.h.b16 %v209
    %v413 = vunpack.c.l.b16 %v210
    %v414 = vunpack.c.h.b16 %v210
    %v415 = vunpack.c.l.b16 %v211
    %v416 = vunpack.c.h.b16 %v211
    %v417 = vunpack.c.l.b16 %v212
    %v418 = vunpack.c.h.b16 %v212
    %v419 = vunpack.c.l.b16 %v213
    %v420 = vunpack.c.h.b16 %v213
    %v421 = vunpack.c.l.b16 %v214
    %v422 = vunpack.c.h.b16 %v214
    %v423 = vunpack.c.l.b16 %v215
    %v424 = vunpack.c.h.b16 %v215
    %v425 = vunpack.c.l.b16 %v216
    %v426 = vunpack.c.h.b16 %v216
    %v427 = vunpack.c.l.b16 %v217
    %v428 = vunpack.c.h.b16 %v217
    %v429 = vunpack.c.l.b16 %v218
    %v430 = vunpack.c.h.b16 %v218
    %v431 = vunpack.c.l.b16 %v219
    %v432 = vunpack.c.h.b16 %v219
    %v433 = vunpack.c.l.b16 %v220
    %v434 = vunpack.c.h.b16 %v220
    %v435 = vpack.c.b16 %v311, %v307
    %v436 = vpack.c.b16 %v312, %v308
    %v437 = vpack.c.b16 %v313, %v309
    %v438 = vpack.c.b16 %v314, %v310
    %v439 = vpack.c.b16 %v319, %v315
    %v440 = vpack.c.b16 %v320, %v316
    %v441 = vpack.c.b16 %v321, %v317
    %v442 = vpack.c.b16 %v322, %v318
    %v443 = vpack.c.b16 %v327, %v323
    %v444 = vpack.c.b16 %v328, %v324
    %v445 = vpack.c.b16 %v329, %v325
    %v446 = vpack.c.b16 %v330, %v326
    %v447 = vpack.c.b16 %v335, %v331
    %v448 = vpack.c.b16 %v336, %v332
    %v449 = vpack.c.b16 %v337, %v333
    %v450 = vpack.c.b16 %v338, %v334
    %v451 = vpack.c.b16 %v343, %v339
    %v452 = vpack.c.b16 %v344, %v340
    %v453 = vpack.c.b16 %v345, %v341
    %v454 = vpack.c.b16 %v346, %v342
    %v455 = vpack.c.b16 %v351, %v347
    %v456 = vpack.c.b16 %v352, %v348
    %v457 = vpack.c.b16 %v353, %v349
    %v458 = vpack.c.b16 %v354, %v350
    %v459 = vpack.c.b16 %v359, %v355
    %v460 = vpack.c.b16 %v360, %v356
    %v461 = vpack.c.b16 %v361, %v357
    %v462 = vpack.c.b16 %v362, %v358
    %v463 = vpack.c.b16 %v367, %v363
    %v464 = vpack.c.b16 %v368, %v364
    %v465 = vpack.c.b16 %v369, %v365
    %v466 = vpack.c.b16 %v370, %v366
    %v467 = vpack.c.b16 %v375, %v371
    %v468 = vpack.c.b16 %v376, %v372
    %v469 = vpack.c.b16 %v377, %v373
    %v470 = vpack.c.b16 %v378, %v374
    %v471 = vpack.c.b16 %v383, %v379
    %v472 = vpack.c.b16 %v384, %v380
    %v473 = vpack.c.b16 %v385, %v381
    %v474 = vpack.c.b16 %v386, %v382
    %v475 = vpack.c.b16 %v391, %v387
    %v476 = vpack.c.b16 %v392, %v388
    %v477 = vpack.c.b16 %v393, %v389
    %v478 = vpack.c.b16 %v394, %v390
    %v479 = vpack.c.b16 %v399, %v395
    %v480 = vpack.c.b16 %v400, %v396
    %v481 = vpack.c.b16 %v401, %v397
    %v482 = vpack.c.b16 %v402, %v398
    %v483 = vpack.c.b16 %v407, %v403
    %v484 = vpack.c.b16 %v408, %v404
    %v485 = vpack.c.b16 %v409, %v405
    %v486 = vpack.c.b16 %v410, %v406
    %v487 = vpack.c.b16 %v415, %v411
    %v488 = vpack.c.b16 %v416, %v412
    %v489 = vpack.c.b16 %v417, %v413
    %v490 = vpack.c.b16 %v418, %v414
    %v491 = vpack.c.b16 %v423, %v419
    %v492 = vpack.c.b16 %v424, %v420
    %v493 = vpack.c.b16 %v425, %v421
    %v494 = vpack.c.b16 %v426, %v422
    %v495 = vpack.c.b16 %v431, %v427
    %v496 = vpack.c.b16 %v432, %v428
    %v497 = vpack.c.b16 %v433, %v429
    %v498 = vpack.c.b16 %v434, %v430
    %563 = vmatprep.subr.bf16.mxu0 %v464
    %564 = vmatpush1.bf16.msra.mxu0 %v463
    %565 = vmatprep.subr.bf16.mxu0 %v460
    %566 = vmatpush1.bf16.msra.mxu0 %v459
    %567 = vmatprep.subr.bf16.mxu0 %v456
    %568 = vmatpush1.bf16.msra.mxu0 %v455
    %569 = vmatprep.subr.bf16.mxu0 %v452
    %570 = vmatpush1.bf16.msra.mxu0 %v451
    %571 = vmatprep.subr.bf16.mxu0 %v448
    %572 = vmatpush1.bf16.msra.mxu0 %v447
    %573 = vmatprep.subr.bf16.mxu0 %v444
    %574 = vmatpush1.bf16.msra.mxu0 %v443
    %575 = vmatprep.subr.bf16.mxu0 %v440
    %576 = vmatpush1.bf16.msra.mxu0 %v439
    %577 = vmatprep.subr.bf16.mxu0 %v436
    %578 = vmatpush1.bf16.msra.mxu0 %v435
    %579 = vmatprep.subr.bf16.mxu0 %v496
    %580 = vmatpush2.bf16.msra.mxu0 %v495
    %581 = vmatprep.subr.bf16.mxu0 %v492
    %582 = vmatpush2.bf16.msra.mxu0 %v491
    %583 = vmatprep.subr.bf16.mxu0 %v488
    %584 = vmatpush2.bf16.msra.mxu0 %v487
    %585 = vmatprep.subr.bf16.mxu0 %v484
    %586 = vmatpush2.bf16.msra.mxu0 %v483
    %587 = vmatprep.subr.bf16.mxu0 %v480
    %588 = vmatpush2.bf16.msra.mxu0 %v479
    %589 = vmatprep.subr.bf16.mxu0 %v476
    %590 = vmatpush2.bf16.msra.mxu0 %v475
    %591 = vmatprep.subr.bf16.mxu0 %v472
    %592 = vmatpush2.bf16.msra.mxu0 %v471
    %593 = vmatprep.subr.bf16.mxu0 %v468
    %594 = vmatpush2.bf16.msra.mxu0 %v467
    %595 = vmatprep.mubr.bf16.mxu0 %v156
    %596 = vmatmul.mubr.bf16.gmra.mxu0 %v155
    %v597 = vpop.f32.mrf.mxu0
    %v598 = vadd.f32 %v226, %v597
    %v599 = vpop.f32.mrf.mxu0
    %v600 = vadd.f32 %v230, %v599
    %v601 = vpop.f32.mrf.mxu0
    %v602 = vpop.f32.mrf.mxu0
    %603 = vdwg.mxu0
    %604 = vmatprep.subr.bf16.mxu0 %v466
    %605 = vmatpush1.bf16.msra.mxu0 %v465
    %606 = vmatprep.subr.bf16.mxu0 %v462
    %607 = vmatpush1.bf16.msra.mxu0 %v461
    %608 = vmatprep.subr.bf16.mxu0 %v458
    %609 = vmatpush1.bf16.msra.mxu0 %v457
    %610 = vmatprep.subr.bf16.mxu0 %v454
    %611 = vmatpush1.bf16.msra.mxu0 %v453
    %612 = vmatprep.subr.bf16.mxu0 %v450
    %613 = vmatpush1.bf16.msra.mxu0 %v449
    %614 = vmatprep.subr.bf16.mxu0 %v446
    %615 = vmatpush1.bf16.msra.mxu0 %v445
    %616 = vmatprep.subr.bf16.mxu0 %v442
    %617 = vmatpush1.bf16.msra.mxu0 %v441
    %618 = vmatprep.subr.bf16.mxu0 %v438
    %619 = vmatpush1.bf16.msra.mxu0 %v437
    %620 = vmatprep.subr.bf16.mxu0 %v498
    %621 = vmatpush2.bf16.msra.mxu0 %v497
    %622 = vmatprep.subr.bf16.mxu0 %v494
    %623 = vmatpush2.bf16.msra.mxu0 %v493
    %624 = vmatprep.subr.bf16.mxu0 %v490
    %625 = vmatpush2.bf16.msra.mxu0 %v489
    %626 = vmatprep.subr.bf16.mxu0 %v486
    %627 = vmatpush2.bf16.msra.mxu0 %v485
    %628 = vmatprep.subr.bf16.mxu0 %v482
    %629 = vmatpush2.bf16.msra.mxu0 %v481
    %630 = vmatprep.subr.bf16.mxu0 %v478
    %631 = vmatpush2.bf16.msra.mxu0 %v477
    %632 = vmatprep.subr.bf16.mxu0 %v474
    %633 = vmatpush2.bf16.msra.mxu0 %v473
    %634 = vmatprep.subr.bf16.mxu0 %v470
    %635 = vmatpush2.bf16.msra.mxu0 %v469
    %636 = vmatprep.mubr.bf16.mxu0 %v156
    %637 = vmatmul.mubr.bf16.gmra.mxu0 %v155
    %v638 = vpop.f32.mrf.mxu0
    %v639 = vadd.f32 %v234, %v638
    %v640 = vpop.f32.mrf.mxu0
    %v641 = vadd.f32 %v238, %v640
    %v642 = vpop.f32.mrf.mxu0
    %v643 = vpop.f32.mrf.mxu0
    %644 = vdwg.mxu0
    %v645 = vmax.f32 %v598, 0.0
    %v646 = vmax.f32 %v600, 0.0
    %v647 = vmax.f32 %v639, 0.0
    %v648 = vmax.f32 %v641, 0.0
    %v649 = vpack.c.bf16 %v645, %v645
    %v650 = vpack.c.bf16 %v646, %v646
    %v651 = vpack.c.bf16 %v647, %v647
    %v652 = vpack.c.bf16 %v648, %v648
    %v653 = vld [vmem:[%s5] sm:$0xf]
    %v654 = vld [vmem:[%s5 + $0x4] sm:$0xf]
    %v655 = vld [vmem:[%s5 + $0x8] sm:$0xf]
    %v656 = vld [vmem:[%s5 + $0xc] sm:$0xf]
    %v657 = vld [vmem:[%s5 + $0x10] sm:$0xf]
    %v658 = vld [vmem:[%s5 + $0x14] sm:$0xf]
    %v659 = vld [vmem:[%s5 + $0x18] sm:$0xf]
    %v660 = vld [vmem:[%s5 + $0x1c] sm:$0xf]
    %v661 = vld [vmem:[%s5 + $0x20] sm:$0xf]
    %v662 = vld [vmem:[%s5 + $0x24] sm:$0xf]
    %v663 = vld [vmem:[%s5 + $0x28] sm:$0xf]
    %v664 = vld [vmem:[%s5 + $0x2c] sm:$0xf]
    %v665 = vld [vmem:[%s5 + $0x30] sm:$0xf]
    %v666 = vld [vmem:[%s5 + $0x34] sm:$0xf]
    %v667 = vld [vmem:[%s5 + $0x38] sm:$0xf]
    %v668 = vld [vmem:[%s5 + $0x3c] sm:$0xf]
    %v669 = vld [vmem:[%s5 + $0x40] sm:$0xf]
    %v670 = vld [vmem:[%s5 + $0x44] sm:$0xf]
    %v671 = vld [vmem:[%s5 + $0x48] sm:$0xf]
    %v672 = vld [vmem:[%s5 + $0x4c] sm:$0xf]
    %v673 = vld [vmem:[%s5 + $0x50] sm:$0xf]
    %v674 = vld [vmem:[%s5 + $0x54] sm:$0xf]
    %v675 = vld [vmem:[%s5 + $0x58] sm:$0xf]
    %v676 = vld [vmem:[%s5 + $0x5c] sm:$0xf]
    %v677 = vld [vmem:[%s5 + $0x60] sm:$0xf]
    %v678 = vld [vmem:[%s5 + $0x64] sm:$0xf]
    %v679 = vld [vmem:[%s5 + $0x68] sm:$0xf]
    %v680 = vld [vmem:[%s5 + $0x6c] sm:$0xf]
    %v681 = vld [vmem:[%s5 + $0x70] sm:$0xf]
    %v682 = vld [vmem:[%s5 + $0x74] sm:$0xf]
    %v683 = vld [vmem:[%s5 + $0x78] sm:$0xf]
    %v684 = vld [vmem:[%s5 + $0x7c] sm:$0xf]
    %v685 = vld [vmem:[%s5 + $0x80] sm:$0xf]
    %v686 = vld [vmem:[%s5 + $0x84] sm:$0xf]
    %v687 = vld [vmem:[%s5 + $0x88] sm:$0xf]
    %v688 = vld [vmem:[%s5 + $0x8c] sm:$0xf]
    %v689 = vld [vmem:[%s5 + $0x90] sm:$0xf]
    %v690 = vld [vmem:[%s5 + $0x94] sm:$0xf]
    %v691 = vld [vmem:[%s5 + $0x98] sm:$0xf]
    %v692 = vld [vmem:[%s5 + $0x9c] sm:$0xf]
    %v693 = vld [vmem:[%s5 + $0xa0] sm:$0xf]
    %v694 = vld [vmem:[%s5 + $0xa4] sm:$0xf]
    %v695 = vld [vmem:[%s5 + $0xa8] sm:$0xf]
    %v696 = vld [vmem:[%s5 + $0xac] sm:$0xf]
    %v697 = vld [vmem:[%s5 + $0xb0] sm:$0xf]
    %v698 = vld [vmem:[%s5 + $0xb4] sm:$0xf]
    %v699 = vld [vmem:[%s5 + $0xb8] sm:$0xf]
    %v700 = vld [vmem:[%s5 + $0xbc] sm:$0xf]
    %v701 = vld [vmem:[%s5 + $0xc0] sm:$0xf]
    %v702 = vld [vmem:[%s5 + $0xc4] sm:$0xf]
    %v703 = vld [vmem:[%s5 + $0xc8] sm:$0xf]
    %v704 = vld [vmem:[%s5 + $0xcc] sm:$0xf]
    %v705 = vld [vmem:[%s5 + $0xd0] sm:$0xf]
    %v706 = vld [vmem:[%s5 + $0xd4] sm:$0xf]
    %v707 = vld [vmem:[%s5 + $0xd8] sm:$0xf]
    %v708 = vld [vmem:[%s5 + $0xdc] sm:$0xf]
    %v709 = vld [vmem:[%s5 + $0xe0] sm:$0xf]
    %v710 = vld [vmem:[%s5 + $0xe4] sm:$0xf]
    %v711 = vld [vmem:[%s5 + $0xe8] sm:$0xf]
    %v712 = vld [vmem:[%s5 + $0xec] sm:$0xf]
    %v713 = vld [vmem:[%s5 + $0xf0] sm:$0xf]
    %v714 = vld [vmem:[%s5 + $0xf4] sm:$0xf]
    %v715 = vld [vmem:[%s5 + $0xf8] sm:$0xf]
    %v716 = vld [vmem:[%s5 + $0xfc] sm:$0xf]
    %v717 = vld [vmem:[%s6] sm:$0x1]
    %v719 = vlaneseq
    %v720 = vshrl.u32 %v719, 7
    %v721 = vsub.s32 0, %v720
    %v722 = vrot.slane %v717, %v721
    %v788 = vunpack.c.l.b16 %v653
    %v789 = vunpack.c.l.b16 %v654
    %v790 = vunpack.c.l.b16 %v655
    %v791 = vunpack.c.l.b16 %v656
    %v792 = vunpack.c.l.b16 %v657
    %v793 = vunpack.c.l.b16 %v658
    %v794 = vunpack.c.l.b16 %v659
    %v795 = vunpack.c.l.b16 %v660
    %v796 = vunpack.c.l.b16 %v661
    %v797 = vunpack.c.l.b16 %v662
    %v798 = vunpack.c.l.b16 %v663
    %v799 = vunpack.c.l.b16 %v664
    %v800 = vunpack.c.l.b16 %v665
    %v801 = vunpack.c.l.b16 %v666
    %v802 = vunpack.c.l.b16 %v667
    %v803 = vunpack.c.l.b16 %v668
    %v804 = vunpack.c.l.b16 %v669
    %v805 = vunpack.c.l.b16 %v670
    %v806 = vunpack.c.l.b16 %v671
    %v807 = vunpack.c.l.b16 %v672
    %v808 = vunpack.c.l.b16 %v673
    %v809 = vunpack.c.l.b16 %v674
    %v810 = vunpack.c.l.b16 %v675
    %v811 = vunpack.c.l.b16 %v676
    %v812 = vunpack.c.l.b16 %v677
    %v813 = vunpack.c.l.b16 %v678
    %v814 = vunpack.c.l.b16 %v679
    %v815 = vunpack.c.l.b16 %v680
    %v816 = vunpack.c.l.b16 %v681
    %v817 = vunpack.c.l.b16 %v682
    %v818 = vunpack.c.l.b16 %v683
    %v819 = vunpack.c.l.b16 %v684
    %v820 = vunpack.c.l.b16 %v685
    %v821 = vunpack.c.l.b16 %v686
    %v822 = vunpack.c.l.b16 %v687
    %v823 = vunpack.c.l.b16 %v688
    %v824 = vunpack.c.l.b16 %v689
    %v825 = vunpack.c.l.b16 %v690
    %v826 = vunpack.c.l.b16 %v691
    %v827 = vunpack.c.l.b16 %v692
    %v828 = vunpack.c.l.b16 %v693
    %v829 = vunpack.c.l.b16 %v694
    %v830 = vunpack.c.l.b16 %v695
    %v831 = vunpack.c.l.b16 %v696
    %v832 = vunpack.c.l.b16 %v697
    %v833 = vunpack.c.l.b16 %v698
    %v834 = vunpack.c.l.b16 %v699
    %v835 = vunpack.c.l.b16 %v700
    %v836 = vunpack.c.l.b16 %v701
    %v837 = vunpack.c.l.b16 %v702
    %v838 = vunpack.c.l.b16 %v703
    %v839 = vunpack.c.l.b16 %v704
    %v840 = vunpack.c.l.b16 %v705
    %v841 = vunpack.c.l.b16 %v706
    %v842 = vunpack.c.l.b16 %v707
    %v843 = vunpack.c.l.b16 %v708
    %v844 = vunpack.c.l.b16 %v709
    %v845 = vunpack.c.l.b16 %v710
    %v846 = vunpack.c.l.b16 %v711
    %v847 = vunpack.c.l.b16 %v712
    %v848 = vunpack.c.l.b16 %v713
    %v849 = vunpack.c.l.b16 %v714
    %v850 = vunpack.c.l.b16 %v715
    %v851 = vunpack.c.l.b16 %v716
    %v852 = vpack.c.b16 %v789, %v788
    %v853 = vpack.c.b16 %v791, %v790
    %v854 = vpack.c.b16 %v793, %v792
    %v855 = vpack.c.b16 %v795, %v794
    %v856 = vpack.c.b16 %v797, %v796
    %v857 = vpack.c.b16 %v799, %v798
    %v858 = vpack.c.b16 %v801, %v800
    %v859 = vpack.c.b16 %v803, %v802
    %v860 = vpack.c.b16 %v805, %v804
    %v861 = vpack.c.b16 %v807, %v806
    %v862 = vpack.c.b16 %v809, %v808
    %v863 = vpack.c.b16 %v811, %v810
    %v864 = vpack.c.b16 %v813, %v812
    %v865 = vpack.c.b16 %v815, %v814
    %v866 = vpack.c.b16 %v817, %v816
    %v867 = vpack.c.b16 %v819, %v818
    %v868 = vpack.c.b16 %v821, %v820
    %v869 = vpack.c.b16 %v823, %v822
    %v870 = vpack.c.b16 %v825, %v824
    %v871 = vpack.c.b16 %v827, %v826
    %v872 = vpack.c.b16 %v829, %v828
    %v873 = vpack.c.b16 %v831, %v830
    %v874 = vpack.c.b16 %v833, %v832
    %v875 = vpack.c.b16 %v835, %v834
    %v876 = vpack.c.b16 %v837, %v836
    %v877 = vpack.c.b16 %v839, %v838
    %v878 = vpack.c.b16 %v841, %v840
    %v879 = vpack.c.b16 %v843, %v842
    %v880 = vpack.c.b16 %v845, %v844
    %v881 = vpack.c.b16 %v847, %v846
    %v882 = vpack.c.b16 %v849, %v848
    %v883 = vpack.c.b16 %v851, %v850
    %916 = vmatprep.subr.bf16.mxu0 0
    %917 = vmatpush1.bf16.msra.mxu0 %v859
    %918 = vmatprep.subr.bf16.mxu0 0
    %919 = vmatpush1.bf16.msra.mxu0 %v858
    %920 = vmatprep.subr.bf16.mxu0 0
    %921 = vmatpush1.bf16.msra.mxu0 %v857
    %922 = vmatprep.subr.bf16.mxu0 0
    %923 = vmatpush1.bf16.msra.mxu0 %v856
    %924 = vmatprep.subr.bf16.mxu0 0
    %925 = vmatpush1.bf16.msra.mxu0 %v855
    %926 = vmatprep.subr.bf16.mxu0 0
    %927 = vmatpush1.bf16.msra.mxu0 %v854
    %928 = vmatprep.subr.bf16.mxu0 0
    %929 = vmatpush1.bf16.msra.mxu0 %v853
    %930 = vmatprep.subr.bf16.mxu0 0
    %931 = vmatpush1.bf16.msra.mxu0 %v852
    %932 = vmatprep.subr.bf16.mxu0 0
    %933 = vmatpush2.bf16.msra.mxu0 %v867
    %934 = vmatprep.subr.bf16.mxu0 0
    %935 = vmatpush2.bf16.msra.mxu0 %v866
    %936 = vmatprep.subr.bf16.mxu0 0
    %937 = vmatpush2.bf16.msra.mxu0 %v865
    %938 = vmatprep.subr.bf16.mxu0 0
    %939 = vmatpush2.bf16.msra.mxu0 %v864
    %940 = vmatprep.subr.bf16.mxu0 0
    %941 = vmatpush2.bf16.msra.mxu0 %v863
    %942 = vmatprep.subr.bf16.mxu0 0
    %943 = vmatpush2.bf16.msra.mxu0 %v862
    %944 = vmatprep.subr.bf16.mxu0 0
    %945 = vmatpush2.bf16.msra.mxu0 %v861
    %946 = vmatprep.subr.bf16.mxu0 0
    %947 = vmatpush2.bf16.msra.mxu0 %v860
    %948 = vmatprep.mubr.bf16.mxu0 %v650
    %949 = vmatmul.mubr.bf16.gmra.mxu0 %v649
    %v950 = vpop.f32.mrf.mxu0
    %v951 = vadd.f32 %v722, %v950
    %v952 = vpop.f32.mrf.mxu0
    %v953 = vpop.f32.mrf.mxu0
    %v954 = vpop.f32.mrf.mxu0
    %955 = vdwg.mxu0
    %956 = vmatprep.subr.bf16.mxu0 0
    %957 = vmatpush1.bf16.msra.mxu0 %v875
    %958 = vmatprep.subr.bf16.mxu0 0
    %959 = vmatpush1.bf16.msra.mxu0 %v874
    %960 = vmatprep.subr.bf16.mxu0 0
    %961 = vmatpush1.bf16.msra.mxu0 %v873
    %962 = vmatprep.subr.bf16.mxu0 0
    %963 = vmatpush1.bf16.msra.mxu0 %v872
    %964 = vmatprep.subr.bf16.mxu0 0
    %965 = vmatpush1.bf16.msra.mxu0 %v871
    %966 = vmatprep.subr.bf16.mxu0 0
    %967 = vmatpush1.bf16.msra.mxu0 %v870
    %968 = vmatprep.subr.bf16.mxu0 0
    %969 = vmatpush1.bf16.msra.mxu0 %v869
    %970 = vmatprep.subr.bf16.mxu0 0
    %971 = vmatpush1.bf16.msra.mxu0 %v868
    %972 = vmatprep.subr.bf16.mxu0 0
    %973 = vmatpush2.bf16.msra.mxu0 %v883
    %974 = vmatprep.subr.bf16.mxu0 0
    %975 = vmatpush2.bf16.msra.mxu0 %v882
    %976 = vmatprep.subr.bf16.mxu0 0
    %977 = vmatpush2.bf16.msra.mxu0 %v881
    %978 = vmatprep.subr.bf16.mxu0 0
    %979 = vmatpush2.bf16.msra.mxu0 %v880
    %980 = vmatprep.subr.bf16.mxu0 0
    %981 = vmatpush2.bf16.msra.mxu0 %v879
    %982 = vmatprep.subr.bf16.mxu0 0
    %983 = vmatpush2.bf16.msra.mxu0 %v878
    %984 = vmatprep.subr.bf16.mxu0 0
    %985 = vmatpush2.bf16.msra.mxu0 %v877
    %986 = vmatprep.subr.bf16.mxu0 0
    %987 = vmatpush2.bf16.msra.mxu0 %v876
    %988 = vmatprep.mubr.bf16.mxu0 %v652
    %989 = vmatmul.mubr.bf16.gmra.mxu0 %v651
    %v990 = vpop.f32.mrf.mxu0
    %v991 = vadd.f32 %v951, %v990
    %v992 = vpop.f32.mrf.mxu0
    %v993 = vpop.f32.mrf.mxu0
    %v994 = vpop.f32.mrf.mxu0
    %995 = vdwg.mxu0
    %v996 = vmax.f32 %v991, 0.0
    %997 = vst.msk [vmem:[#allocation5] sm:$0xff] %vm98, %v996
    // Predicated region
    $region34: #{tpu_custom_call.1} parent=1 // pred_check
      _
    $region35: #{tpu_custom_call.1} parent=1 // pred_check_branch
      %999 = sbr.rel (0) target = $region37
    $region36: #{tpu_custom_call.1} parent=1 // pred_region
      %s1001 = ssub.s32 128, 128
      %1002 = vsyncadd [#allocation4], %s1001
      %s1004 = sshll.u32 [#allocation5], 4
      %s1005 = int_to_ptr.vmem [resolvable:$true] %s1004
      %1007 = dma.vmem_to_hbm [thread:$0]  %s1005, 128, %s7, [#allocation4]
    $region37: #{tpu_custom_call.1} parent=1 // pred_fallthru
      _
    // Predicated region
    $region38: #{tpu_custom_call.1} parent=1 // pred_check
      _
    $region39: #{tpu_custom_call.1} parent=1 // pred_check_branch
      %1009 = sbr.rel (0) target = $region41
    $region40: #{tpu_custom_call.1} parent=1 // pred_region
      %1010 = dma.done [#allocation4], 128
    $region41: #{tpu_custom_call.1} parent=1 // pred_fallthru
      _
    %1011 = vsyncpa [#allocation3], 1
    %1012 = vsyncpa [#allocation4], 1

</llo_original>
